<compile_context>
chip_gen: v5e
topology: v5e:2x2
jax: 0.10.0
libtpu: 0.0.40
codegen_flags: <defaults>
</compile_context>

<pallas_src>
import jax
import jax.numpy as jnp
from jax.experimental import pallas as pl
from jax.experimental.pallas import tpu as pltpu

LANE = 128                      # TPU lane width
TILE_S_MAX = 16384              # max samples per grid step (review: 8192-32768)
SINGLE_BLOCK_MAX = 1024         # below this, use one whole-array block (no grid)
VMEM_LIMIT_BYTES = 48 * 1024 * 1024   # > v5e/v6e scoped defaults, < v7x 64 MiB phys


# ----------------------------------------------------------------------------
# Kernel
# ----------------------------------------------------------------------------
def make_kernel(tech_layers, hidden):
    """Kernel closed over the (static) tech-layer count and hidden size."""
    T, H = tech_layers, hidden

    def kernel(x_ref, w_in_ref, b_in_ref, w_comb_ref, bias_ref, out_ref):
        x = x_ref[...]            # (T, S)      samples on lanes
        w_in = w_in_ref[...]      # (H, T)
        b_in = b_in_ref[...]      # (H, T)
        s = x.shape[1]

        acc = jnp.zeros((8, s), jnp.float32)

        # Unrolled over tech layers (T is tiny & static).  Per tech:
        #   VPU : h = relu(w_in_t * x_t + b_in_t)   -> (H, S)
        #         (H,1) and (1,S) operands are lane-/sublane-splats fused
        #         into the vmul/vadd — no materialized (H,S) broadcasts.
        #   MXU : acc += w_comb8_t @ h              -> (8, S)
        #         rows 1..7 of the lhs are zero; the hidden-axis reduce and
        #         the *w_c*w_out scaling ride the otherwise-idle MXU slot.
        for t in range(T):
            h = jnp.maximum(w_in[:, t:t + 1] * x[t:t + 1, :] + b_in[:, t:t + 1],
                            0.0)
            acc = acc + jnp.dot(w_comb_ref[:, t * H:(t + 1) * H], h,
                                preferred_element_type=jnp.float32)

        # Row 0 holds the real result.  out_layer & combinor biases are folded
        # into one scalar; no final activation in GeneGroup.
        out_ref[...] = (acc[0:1, :] + bias_ref[...]).astype(out_ref.dtype)

    return kernel


# ----------------------------------------------------------------------------
# Wrapper
# ----------------------------------------------------------------------------
def _round_up(n, m):
    return ((n + m - 1) // m) * m


def _choose_tile(S, H, tile_s_max):
    """Tile for the sample (lane) axis on the gridded path."""
    s_cover = _round_up(S, LANE)
    # VMEM guard (all generations): ~4 (H, tile) f32 temporaries + x/out
    # double-buffers per step; keep this comfortably under ~24 MiB.
    bytes_per_sample = 4 * (4 * H + 8)
    vmem_cap = max(LANE, ((24 << 20) // bytes_per_sample) // LANE * LANE)
    tile_s_max = max(LANE, min(tile_s_max, vmem_cap))
    # Keep >= 2 grid tiles so both v7x TensorCores stay busy.
    tile = min(tile_s_max, _round_up(pl.cdiv(s_cover, 2), LANE))
    return max(LANE, tile)


def gene_group_forward(x, params, *, tile_s_max=TILE_S_MAX):
    """GeneGroup.forward via pallas_call.

    x      : (tech_layers, samples) float32 — same layout the PyTorch forward
             indexes (x[i:i+1].T per tech).
    params : (w_in, b_in, w_out, b_out, w_c, b_c) in PyTorch layout:
             w_in, b_in, w_out : (tech_layers, hidden)
             b_out, w_c        : (tech_layers,)
             b_c               : scalar
    returns: (samples, 1) float32 — matches the module output.
    """
    w_in, b_in, w_out, b_out, w_c, b_c = params
    T, S = x.shape
    H = int(w_in.shape[1])

    x = x.astype(jnp.float32)                 # no copy if already f32; no pad

    # Layout plumbing on tiny params only (reused across all samples).
    w_in_ht = jnp.asarray(w_in, jnp.float32).T                 # (H, T)
    b_in_ht = jnp.asarray(b_in, jnp.float32).T                 # (H, T)
    w_c_f = jnp.asarray(w_c, jnp.float32)
    # Combinor folded into out_layer weights; lhs padded to 8 sublane rows.
    w_comb_row = (jnp.asarray(w_out, jnp.float32) * w_c_f[:, None]).reshape(1, T * H)
    w_comb8 = jnp.concatenate(
        [w_comb_row, jnp.zeros((7, T * H), jnp.float32)], axis=0)   # (8, T*H)
    bias_const = (jnp.sum(w_c_f * jnp.asarray(b_out, jnp.float32))
                  + jnp.asarray(b_c, jnp.float32)).reshape(1, 1)    # (1, 1)

    inputs = (x, w_in_ht, b_in_ht, w_comb8, bias_const)
    kernel = make_kernel(T, H)
    out_shape = jax.ShapeDtypeStruct((1, S), jnp.float32)

    s_cover = _round_up(max(S, 1), LANE)
    if s_cover <= SINGLE_BLOCK_MAX:
        # Single whole-array block, no grid: no dead double-buffering or
        # pipeline prologue/epilogue for tiny batches.
        out = pl.pallas_call(
            kernel,
            out_shape=out_shape,
            compiler_params=pltpu.CompilerParams(
                vmem_limit_bytes=VMEM_LIMIT_BYTES),
        )(*inputs)
    else:
        tile = _choose_tile(S, H, tile_s_max)
        num_tiles = pl.cdiv(S, tile)          # last tile may be ragged: Pallas
        #                                       masks the out-of-bounds write.
        const_map = lambda i: (0, 0)
        in_specs = [pl.BlockSpec((T, tile), lambda i: (0, i))]
        in_specs += [pl.BlockSpec(a.shape, const_map) for a in inputs[1:]]
        out_specs = pl.BlockSpec((1, tile), lambda i: (0, i))

        out = pl.pallas_call(
            kernel,
            out_shape=out_shape,
            grid=(num_tiles,),
            in_specs=in_specs,
            out_specs=out_specs,
            compiler_params=pltpu.CompilerParams(
                dimension_semantics=("parallel",),
                vmem_limit_bytes=VMEM_LIMIT_BYTES),
        )(*inputs)

    # Back to the PyTorch GeneGroup output layout: (samples, 1).
    return out.T


# ----------------------------------------------------------------------------
# Pure-JAX reference (PyTorch semantics, for the correctness check)
# ----------------------------------------------------------------------------
def gene_group_ref(x, params):
    w_in, b_in, w_out, b_out, w_c, b_c = params
    cols = []
    for t in range(x.shape[0]):
        xt = x[t][:, None]                                              # (S, 1)
        h = jnp.maximum(xt * w_in[t][None, :] + b_in[t][None, :], 0.0)  # (S, H)
        y = jnp.sum(h * w_out[t][None, :], axis=1, keepdims=True) + b_out[t]
        cols.append(y)                                                  # (S, 1)
    y_cat = jnp.concatenate(cols, axis=-1)                              # (S, T)
    return jnp.sum(y_cat * w_c[None, :], axis=1, keepdims=True) + b_c


# ----------------------------------------------------------------------------
# Deterministic parameter construction (PyTorch-style uniform init bounds)
# ----------------------------------------------------------------------------
def init_params(key, tech_layers, hidden_size):
    ks = jax.random.split(key, 6)
    b_in_bound = 1.0                              # fan_in of in_layer is 1
    w_in = jax.random.uniform(ks[0], (tech_layers, hidden_size), jnp.float32,
                              -b_in_bound, b_in_bound)
    b_in = jax.random.uniform(ks[1], (tech_layers, hidden_size), jnp.float32,
                              -b_in_bound, b_in_bound)
    b_out_bound = 1.0 / (hidden_size ** 0.5)
    w_out = jax.random.uniform(ks[2], (tech_layers, hidden_size), jnp.float32,
                               -b_out_bound, b_out_bound)
    b_out = jax.random.uniform(ks[3], (tech_layers,), jnp.float32,
                               -b_out_bound, b_out_bound)
    c_bound = 1.0 / (tech_layers ** 0.5)
    w_c = jax.random.uniform(ks[4], (tech_layers,), jnp.float32,
                             -c_bound, c_bound)
    b_c = jax.random.uniform(ks[5], (), jnp.float32, -c_bound, c_bound)
    return (w_in, b_in, w_out, b_out, w_c, b_c)


# ----------------------------------------------------------------------------
if __name__ == "__main__":
    TECH_LAYERS = 4
    HIDDEN = 32
    SAMPLES = 8

    key = jax.random.PRNGKey(0)
    k_x, k_p, k_x2 = jax.random.split(key, 3)

    x = jax.random.normal(k_x, (TECH_LAYERS, SAMPLES), jnp.float32)
    params = init_params(k_p, TECH_LAYERS, HIDDEN)

    # Small batch: single whole-array block (no grid) path.
    out = jax.block_until_ready(gene_group_forward(x, params))
    ref = gene_group_ref(x, params)
    assert out.shape == (SAMPLES, 1), out.shape
    assert jnp.allclose(out, ref, atol=1e-4, rtol=1e-4), (out, ref)

    # Larger batch: exercises the tiled grid path (>=2 tiles, ragged masked
    # last tile, megacore-parallel semantics) without any wrapper-side pad.
    S2 = 2500
    x2 = jax.random.normal(k_x2, (TECH_LAYERS, S2), jnp.float32)
    out2 = jax.block_until_ready(gene_group_forward(x2, params))
    ref2 = gene_group_ref(x2, params)
    assert out2.shape == (S2, 1), out2.shape
    assert jnp.allclose(out2, ref2, atol=1e-4, rtol=1e-4)

    print("KERNEL_OK")
</pallas_src>

<mosaic_0001>
module attributes {stable_mosaic.version = 11 : i64} {
  func.func @kernel(%arg0: memref<4x8xf32, #tpu.memory_space<vmem>>, %arg1: memref<32x4xf32, #tpu.memory_space<vmem>>, %arg2: memref<32x4xf32, #tpu.memory_space<vmem>>, %arg3: memref<8x128xf32, #tpu.memory_space<vmem>>, %arg4: memref<1x1xf32, #tpu.memory_space<vmem>>, %arg5: memref<1x8xf32, #tpu.memory_space<vmem>>) attributes {dimension_semantics = [], scalar_prefetch = 0 : i64, scratch_operands = 0 : i64, tpu.core_type = #tpu.core_type<tc>} {
    %c0 = arith.constant 0 : index
    %c0_0 = arith.constant 0 : index
    %0 = vector.load %arg0[%c0, %c0_0] : memref<4x8xf32, #tpu.memory_space<vmem>>, vector<4x8xf32>
    %c0_1 = arith.constant 0 : index
    %c0_2 = arith.constant 0 : index
    %1 = vector.load %arg1[%c0_1, %c0_2] : memref<32x4xf32, #tpu.memory_space<vmem>>, vector<32x4xf32>
    %c0_3 = arith.constant 0 : index
    %c0_4 = arith.constant 0 : index
    %2 = vector.load %arg2[%c0_3, %c0_4] : memref<32x4xf32, #tpu.memory_space<vmem>>, vector<32x4xf32>
    %cst = arith.constant 0.000000e+00 : f32
    %3 = vector.broadcast %cst : f32 to vector<8x8xf32>
    %4 = vector.extract_strided_slice %1 {offsets = [0, 0], sizes = [32, 1], strides = [1, 1]} : vector<32x4xf32> to vector<32x1xf32>
    %5 = vector.extract_strided_slice %0 {offsets = [0, 0], sizes = [1, 8], strides = [1, 1]} : vector<4x8xf32> to vector<1x8xf32>
    %6 = vector.broadcast %4 : vector<32x1xf32> to vector<32x8xf32>
    %7 = vector.broadcast %5 : vector<1x8xf32> to vector<32x8xf32>
    %8 = arith.mulf %6, %7 : vector<32x8xf32>
    %9 = vector.extract_strided_slice %2 {offsets = [0, 0], sizes = [32, 1], strides = [1, 1]} : vector<32x4xf32> to vector<32x1xf32>
    %10 = vector.broadcast %9 : vector<32x1xf32> to vector<32x8xf32>
    %11 = arith.addf %8, %10 : vector<32x8xf32>
    %cst_5 = arith.constant 0.000000e+00 : f32
    %12 = vector.broadcast %cst_5 : f32 to vector<32x8xf32>
    %13 = arith.maximumf %11, %12 : vector<32x8xf32>
    %c0_6 = arith.constant 0 : index
    %c0_7 = arith.constant 0 : index
    %14 = vector.load %arg3[%c0_6, %c0_7] : memref<8x128xf32, #tpu.memory_space<vmem>>, vector<8x32xf32>
    %cst_8 = arith.constant dense<0.000000e+00> : vector<8x8xf32>
    %15 = tpu.matmul %14, %13, %cst_8 {dimension_numbers = #tpu.dot_dimension_numbers<[1], [0], [0], [1], [0, 0, 1, 1], [], []>} : vector<8x32xf32>, vector<32x8xf32>, vector<8x8xf32> -> vector<8x8xf32>
    %16 = arith.addf %3, %15 : vector<8x8xf32>
    %17 = vector.extract_strided_slice %1 {offsets = [0, 1], sizes = [32, 1], strides = [1, 1]} : vector<32x4xf32> to vector<32x1xf32>
    %18 = vector.extract_strided_slice %0 {offsets = [1, 0], sizes = [1, 8], strides = [1, 1]} : vector<4x8xf32> to vector<1x8xf32>
    %19 = vector.broadcast %17 : vector<32x1xf32> to vector<32x8xf32>
    %20 = vector.broadcast %18 : vector<1x8xf32> to vector<32x8xf32>
    %21 = arith.mulf %19, %20 : vector<32x8xf32>
    %22 = vector.extract_strided_slice %2 {offsets = [0, 1], sizes = [32, 1], strides = [1, 1]} : vector<32x4xf32> to vector<32x1xf32>
    %23 = vector.broadcast %22 : vector<32x1xf32> to vector<32x8xf32>
    %24 = arith.addf %21, %23 : vector<32x8xf32>
    %cst_9 = arith.constant 0.000000e+00 : f32
    %25 = vector.broadcast %cst_9 : f32 to vector<32x8xf32>
    %26 = arith.maximumf %24, %25 : vector<32x8xf32>
    %c0_10 = arith.constant 0 : index
    %c32 = arith.constant 32 : index
    %27 = vector.load %arg3[%c0_10, %c32] : memref<8x128xf32, #tpu.memory_space<vmem>>, vector<8x32xf32>
    %cst_11 = arith.constant dense<0.000000e+00> : vector<8x8xf32>
    %28 = tpu.matmul %27, %26, %cst_11 {dimension_numbers = #tpu.dot_dimension_numbers<[1], [0], [0], [1], [0, 0, 1, 1], [], []>} : vector<8x32xf32>, vector<32x8xf32>, vector<8x8xf32> -> vector<8x8xf32>
    %29 = arith.addf %16, %28 : vector<8x8xf32>
    %30 = vector.extract_strided_slice %1 {offsets = [0, 2], sizes = [32, 1], strides = [1, 1]} : vector<32x4xf32> to vector<32x1xf32>
    %31 = vector.extract_strided_slice %0 {offsets = [2, 0], sizes = [1, 8], strides = [1, 1]} : vector<4x8xf32> to vector<1x8xf32>
    %32 = vector.broadcast %30 : vector<32x1xf32> to vector<32x8xf32>
    %33 = vector.broadcast %31 : vector<1x8xf32> to vector<32x8xf32>
    %34 = arith.mulf %32, %33 : vector<32x8xf32>
    %35 = vector.extract_strided_slice %2 {offsets = [0, 2], sizes = [32, 1], strides = [1, 1]} : vector<32x4xf32> to vector<32x1xf32>
    %36 = vector.broadcast %35 : vector<32x1xf32> to vector<32x8xf32>
    %37 = arith.addf %34, %36 : vector<32x8xf32>
    %cst_12 = arith.constant 0.000000e+00 : f32
    %38 = vector.broadcast %cst_12 : f32 to vector<32x8xf32>
    %39 = arith.maximumf %37, %38 : vector<32x8xf32>
    %c0_13 = arith.constant 0 : index
    %c64 = arith.constant 64 : index
    %40 = vector.load %arg3[%c0_13, %c64] : memref<8x128xf32, #tpu.memory_space<vmem>>, vector<8x32xf32>
    %cst_14 = arith.constant dense<0.000000e+00> : vector<8x8xf32>
    %41 = tpu.matmul %40, %39, %cst_14 {dimension_numbers = #tpu.dot_dimension_numbers<[1], [0], [0], [1], [0, 0, 1, 1], [], []>} : vector<8x32xf32>, vector<32x8xf32>, vector<8x8xf32> -> vector<8x8xf32>
    %42 = arith.addf %29, %41 : vector<8x8xf32>
    %43 = vector.extract_strided_slice %1 {offsets = [0, 3], sizes = [32, 1], strides = [1, 1]} : vector<32x4xf32> to vector<32x1xf32>
    %44 = vector.extract_strided_slice %0 {offsets = [3, 0], sizes = [1, 8], strides = [1, 1]} : vector<4x8xf32> to vector<1x8xf32>
    %45 = vector.broadcast %43 : vector<32x1xf32> to vector<32x8xf32>
    %46 = vector.broadcast %44 : vector<1x8xf32> to vector<32x8xf32>
    %47 = arith.mulf %45, %46 : vector<32x8xf32>
    %48 = vector.extract_strided_slice %2 {offsets = [0, 3], sizes = [32, 1], strides = [1, 1]} : vector<32x4xf32> to vector<32x1xf32>
    %49 = vector.broadcast %48 : vector<32x1xf32> to vector<32x8xf32>
    %50 = arith.addf %47, %49 : vector<32x8xf32>
    %cst_15 = arith.constant 0.000000e+00 : f32
    %51 = vector.broadcast %cst_15 : f32 to vector<32x8xf32>
    %52 = arith.maximumf %50, %51 : vector<32x8xf32>
    %c0_16 = arith.constant 0 : index
    %c96 = arith.constant 96 : index
    %53 = vector.load %arg3[%c0_16, %c96] : memref<8x128xf32, #tpu.memory_space<vmem>>, vector<8x32xf32>
    %cst_17 = arith.constant dense<0.000000e+00> : vector<8x8xf32>
    %54 = tpu.matmul %53, %52, %cst_17 {dimension_numbers = #tpu.dot_dimension_numbers<[1], [0], [0], [1], [0, 0, 1, 1], [], []>} : vector<8x32xf32>, vector<32x8xf32>, vector<8x8xf32> -> vector<8x8xf32>
    %55 = arith.addf %42, %54 : vector<8x8xf32>
    %56 = vector.extract_strided_slice %55 {offsets = [0, 0], sizes = [1, 8], strides = [1, 1]} : vector<8x8xf32> to vector<1x8xf32>
    %c0_18 = arith.constant 0 : index
    %c0_19 = arith.constant 0 : index
    %57 = vector.load %arg4[%c0_18, %c0_19] : memref<1x1xf32, #tpu.memory_space<vmem>>, vector<1x1xf32>
    %58 = vector.broadcast %57 : vector<1x1xf32> to vector<1x8xf32>
    %59 = arith.addf %56, %58 : vector<1x8xf32>
    %c0_20 = arith.constant 0 : index
    %c0_21 = arith.constant 0 : index
    %60 = vector.load %arg5[%c0_20, %c0_21] : memref<1x8xf32, #tpu.memory_space<vmem>>, vector<1x8xf32>
    tpu.vector_store %arg5[%c0_20, %c0_21], %59 {strides = array<i32>} : memref<1x8xf32, #tpu.memory_space<vmem>>, vector<1x8xf32>,
    return
  }
}

</mosaic_0001>

<llo_original>
// kernel: tpu_custom_call.1
$region0: #{tpu_custom_call.1}
  #allocation0 [shape = 'u32[]', space=smem, size = 0x4, offset = 0x4, fixed_abs, tag = 'smem constant byte address 0x4 - core index']
  #allocation1 [shape = 'u32[72,128]{1,0:T(1,128)}', space=vmem, size = 0x9000, scoped, tag = 'internal scratch']
  #allocation2 [shape = 'f32[1,1]{1,0:T(1,128)S(1)}', space=vmem, size = 0x200, scoped, tag = 'scoped memory for tpu_custom_call.1']
  %s0 = inlined_call_operand.vmem [shape: f32[4,8], index: 0, kind: input, shape index: {}]
  %s1 = inlined_call_operand.vmem [shape: f32[32,4], index: 1, kind: input, shape index: {}]
  %s2 = inlined_call_operand.vmem [shape: f32[32,4], index: 2, kind: input, shape index: {}]
  %s3 = inlined_call_operand.vmem [shape: f32[8,128], index: 3, kind: input, shape index: {}]
  %s4 = inlined_call_operand.<no memory space> [shape: f32[1,1], index: 4, kind: input, shape index: {}]
  %s5 = inlined_call_operand.hbm [shape: f32[1,8], index: 5, kind: output, shape index: {}]
  %s6 = sld [smem:[#allocation0]]
  $region30: #{tpu_custom_call.1} parent=0
    _
  %s8 = ssub.s32 1, %s6
  %s9 = scalar_select 0, %s8, %s6
  %v10 = vstv %s4
  %11 = vst [vmem:[#allocation2] sm:$0x1] %v10
  $region1: #{tpu_custom_call.1} parent=0
    #allocation3 [shape = 'u8[512]{0}', space=vmem, size = 0x400, scoped, tag = 'output window, operand 0, single buffered']
    #allocation4 [shape = 's32[1]{0}', space=sflag, size = 0x4, scoped, tag = 'scoped memory for tpu_custom_call.1']
    %12 = vsyncpa [#allocation4], 0
    // Predicated region
    $region2: #{tpu_custom_call.1} parent=1 // pred_check
      _
    $region3: #{tpu_custom_call.1} parent=1 // pred_check_branch
      %14 = sbr.rel (0) target = $region5
    $region4: #{tpu_custom_call.1} parent=1 // pred_region
      _
    $region5: #{tpu_custom_call.1} parent=1 // pred_fallthru
      _
    // Predicated region
    $region6: #{tpu_custom_call.1} parent=1 // pred_check
      _
    $region7: #{tpu_custom_call.1} parent=1 // pred_check_branch
      %16 = sbr.rel (0) target = $region9
    $region8: #{tpu_custom_call.1} parent=1 // pred_region
      _
    $region9: #{tpu_custom_call.1} parent=1 // pred_fallthru
      _
    // Predicated region
    $region10: #{tpu_custom_call.1} parent=1 // pred_check
      _
    $region11: #{tpu_custom_call.1} parent=1 // pred_check_branch
      %18 = sbr.rel (0) target = $region13
    $region12: #{tpu_custom_call.1} parent=1 // pred_region
      _
    $region13: #{tpu_custom_call.1} parent=1 // pred_fallthru
      _
    // Predicated region
    $region14: #{tpu_custom_call.1} parent=1 // pred_check
      _
    $region15: #{tpu_custom_call.1} parent=1 // pred_check_branch
      %20 = sbr.rel (0) target = $region17
    $region16: #{tpu_custom_call.1} parent=1 // pred_region
      _
    $region17: #{tpu_custom_call.1} parent=1 // pred_fallthru
      _
    // Predicated region
    $region18: #{tpu_custom_call.1} parent=1 // pred_check
      _
    $region19: #{tpu_custom_call.1} parent=1 // pred_check_branch
      %22 = sbr.rel (0) target = $region21
    $region20: #{tpu_custom_call.1} parent=1 // pred_region
      _
    $region21: #{tpu_custom_call.1} parent=1 // pred_fallthru
      _
    %v23 = vld [vmem:[%s0] sm:$0xf]
    %v24 = vld [vmem:[%s1] sm:$0xff]
    %v25 = vld [vmem:[%s1 + $0x8] sm:$0xff]
    %v26 = vld [vmem:[%s1 + $0x10] sm:$0xff]
    %v27 = vld [vmem:[%s1 + $0x18] sm:$0xff]
    %v28 = vld [vmem:[%s2] sm:$0xff]
    %v29 = vld [vmem:[%s2 + $0x8] sm:$0xff]
    %v30 = vld [vmem:[%s2 + $0x10] sm:$0xff]
    %v31 = vld [vmem:[%s2 + $0x18] sm:$0xff]
    %33 = vset.pattern.permute.xlu0 0
    %34 = vperm.xlu0 %33, %v24
    %v35 = vpop.permute.xlu0 %34
    %38 = vset.pattern.permute.xlu0 0
    %39 = vperm.xlu0 %38, %v25
    %v40 = vpop.permute.xlu0 %39
    %43 = vset.pattern.permute.xlu0 0
    %44 = vperm.xlu0 %43, %v26
    %v45 = vpop.permute.xlu0 %44
    %48 = vset.pattern.permute.xlu0 0
    %49 = vperm.xlu0 %48, %v27
    %v50 = vpop.permute.xlu0 %49
    %v52 = vperm.slane %v23, 0
    %v53 = vmul.f32 %v35, %v52
    %v54 = vmul.f32 %v40, %v52
    %v55 = vmul.f32 %v45, %v52
    %v56 = vmul.f32 %v50, %v52
    %58 = vset.pattern.permute.xlu0 0
    %59 = vperm.xlu0 %58, %v28
    %v60 = vpop.permute.xlu0 %59
    %63 = vset.pattern.permute.xlu0 0
    %64 = vperm.xlu0 %63, %v29
    %v65 = vpop.permute.xlu0 %64
    %68 = vset.pattern.permute.xlu0 0
    %69 = vperm.xlu0 %68, %v30
    %v70 = vpop.permute.xlu0 %69
    %73 = vset.pattern.permute.xlu0 0
    %74 = vperm.xlu0 %73, %v31
    %v75 = vpop.permute.xlu0 %74
    %v77 = vadd.f32 %v53, %v60
    %v78 = vadd.f32 %v54, %v65
    %v79 = vadd.f32 %v55, %v70
    %v80 = vadd.f32 %v56, %v75
    %v81 = vmax.f32 %v77, 0.0
    %v82 = vmax.f32 %v78, 0.0
    %v83 = vmax.f32 %v79, 0.0
    %v84 = vmax.f32 %v80, 0.0
    %v85 = vld [vmem:[%s3] sm:$0xff]
    %86 = vset.pattern.permute.xlu0 1
    %87 = vperm.xlu0 %86, %v24
    %v88 = vpop.permute.xlu0 %87
    %90 = vset.pattern.permute.xlu0 1
    %91 = vperm.xlu0 %90, %v25
    %v92 = vpop.permute.xlu0 %91
    %94 = vset.pattern.permute.xlu0 1
    %95 = vperm.xlu0 %94, %v26
    %v96 = vpop.permute.xlu0 %95
    %98 = vset.pattern.permute.xlu0 1
    %99 = vperm.xlu0 %98, %v27
    %v100 = vpop.permute.xlu0 %99
    %v102 = vperm.slane %v23, 1
    %v103 = vmul.f32 %v88, %v102
    %v104 = vmul.f32 %v92, %v102
    %v105 = vmul.f32 %v96, %v102
    %v106 = vmul.f32 %v100, %v102
    %107 = vset.pattern.permute.xlu0 1
    %108 = vperm.xlu0 %107, %v28
    %v109 = vpop.permute.xlu0 %108
    %111 = vset.pattern.permute.xlu0 1
    %112 = vperm.xlu0 %111, %v29
    %v113 = vpop.permute.xlu0 %112
    %115 = vset.pattern.permute.xlu0 1
    %116 = vperm.xlu0 %115, %v30
    %v117 = vpop.permute.xlu0 %116
    %119 = vset.pattern.permute.xlu0 1
    %120 = vperm.xlu0 %119, %v31
    %v121 = vpop.permute.xlu0 %120
    %v123 = vadd.f32 %v103, %v109
    %v124 = vadd.f32 %v104, %v113
    %v125 = vadd.f32 %v105, %v117
    %v126 = vadd.f32 %v106, %v121
    %v127 = vmax.f32 %v123, 0.0
    %v128 = vmax.f32 %v124, 0.0
    %v129 = vmax.f32 %v125, 0.0
    %v130 = vmax.f32 %v126, 0.0
    %132 = vrot.lane.b32.xlu0 %v85, 96
    %v133 = vpop.permute.xlu0 %132
    %vm134 = vcmask 261120
    %v135 = vsel %vm134, %v133, 0
    %137 = vmatpush.msra.mxu0 0.0
    %138 = vmatpush.msra.mxu0 0.0
    %139 = vmatpush.msra.mxu0 0.0
    %140 = vmatpush.msra.mxu0 0.0
    %141 = vmatpush.msra.mxu0 0.0
    %142 = vmatpush.msra.mxu0 0.0
    %143 = vmatpush.msra.mxu0 0.0
    %144 = vmatpush.msra.mxu0 0.0
    %145 = vmatpush.msra.mxu0 0.0
    %146 = vmatpush.msra.mxu0 0.0
    %147 = vmatpush.msra.mxu0 0.0
    %148 = vmatpush.msra.mxu0 0.0
    %149 = vmatpush.msra.mxu0 %v130
    %150 = vmatpush.msra.mxu0 %v129
    %151 = vmatpush.msra.mxu0 %v128
    %152 = vmatpush.msra.mxu0 %v127
    %153 = vmatmul.f32.gmra.mxu0 %v135
    %v154 = vpop.f32.mrf.mxu0
    %v155 = vadd.f32 0.0, %v154
    %156 = vdwg.mxu0
    %v157 = vsel %vm134, %v85, 0
    %159 = vmatpush.msra.mxu0 0.0
    %160 = vmatpush.msra.mxu0 0.0
    %161 = vmatpush.msra.mxu0 0.0
    %162 = vmatpush.msra.mxu0 0.0
    %163 = vmatpush.msra.mxu0 0.0
    %164 = vmatpush.msra.mxu0 0.0
    %165 = vmatpush.msra.mxu0 0.0
    %166 = vmatpush.msra.mxu0 0.0
    %167 = vmatpush.msra.mxu0 0.0
    %168 = vmatpush.msra.mxu0 0.0
    %169 = vmatpush.msra.mxu0 0.0
    %170 = vmatpush.msra.mxu0 0.0
    %171 = vmatpush.msra.mxu0 %v84
    %172 = vmatpush.msra.mxu0 %v83
    %173 = vmatpush.msra.mxu0 %v82
    %174 = vmatpush.msra.mxu0 %v81
    %175 = vmatmul.f32.gmra.mxu0 %v157
    %v176 = vpop.f32.mrf.mxu0
    %v177 = vadd.f32 %v155, %v176
    %178 = vdwg.mxu0
    %179 = vset.pattern.permute.xlu0 2
    %180 = vperm.xlu0 %179, %v24
    %v181 = vpop.permute.xlu0 %180
    %183 = vset.pattern.permute.xlu0 2
    %184 = vperm.xlu0 %183, %v25
    %v185 = vpop.permute.xlu0 %184
    %187 = vset.pattern.permute.xlu0 2
    %188 = vperm.xlu0 %187, %v26
    %v189 = vpop.permute.xlu0 %188
    %191 = vset.pattern.permute.xlu0 2
    %192 = vperm.xlu0 %191, %v27
    %v193 = vpop.permute.xlu0 %192
    %v195 = vperm.slane %v23, 2
    %v196 = vmul.f32 %v181, %v195
    %v197 = vmul.f32 %v185, %v195
    %v198 = vmul.f32 %v189, %v195
    %v199 = vmul.f32 %v193, %v195
    %200 = vset.pattern.permute.xlu0 2
    %201 = vperm.xlu0 %200, %v28
    %v202 = vpop.permute.xlu0 %201
    %204 = vset.pattern.permute.xlu0 2
    %205 = vperm.xlu0 %204, %v29
    %v206 = vpop.permute.xlu0 %205
    %208 = vset.pattern.permute.xlu0 2
    %209 = vperm.xlu0 %208, %v30
    %v210 = vpop.permute.xlu0 %209
    %212 = vset.pattern.permute.xlu0 2
    %213 = vperm.xlu0 %212, %v31
    %v214 = vpop.permute.xlu0 %213
    %v216 = vadd.f32 %v196, %v202
    %v217 = vadd.f32 %v197, %v206
    %v218 = vadd.f32 %v198, %v210
    %v219 = vadd.f32 %v199, %v214
    %v220 = vmax.f32 %v216, 0.0
    %v221 = vmax.f32 %v217, 0.0
    %v222 = vmax.f32 %v218, 0.0
    %v223 = vmax.f32 %v219, 0.0
    %224 = vrot.lane.b32.xlu0 %v85, 64
    %v225 = vpop.permute.xlu0 %224
    %v226 = vsel %vm134, %v225, 0
    %228 = vmatpush.msra.mxu0 0.0
    %229 = vmatpush.msra.mxu0 0.0
    %230 = vmatpush.msra.mxu0 0.0
    %231 = vmatpush.msra.mxu0 0.0
    %232 = vmatpush.msra.mxu0 0.0
    %233 = vmatpush.msra.mxu0 0.0
    %234 = vmatpush.msra.mxu0 0.0
    %235 = vmatpush.msra.mxu0 0.0
    %236 = vmatpush.msra.mxu0 0.0
    %237 = vmatpush.msra.mxu0 0.0
    %238 = vmatpush.msra.mxu0 0.0
    %239 = vmatpush.msra.mxu0 0.0
    %240 = vmatpush.msra.mxu0 %v223
    %241 = vmatpush.msra.mxu0 %v222
    %242 = vmatpush.msra.mxu0 %v221
    %243 = vmatpush.msra.mxu0 %v220
    %244 = vmatmul.f32.gmra.mxu0 %v226
    %v245 = vpop.f32.mrf.mxu0
    %v246 = vadd.f32 0.0, %v245
    %247 = vdwg.mxu0
    %v248 = vadd.f32 %v177, %v246
    %249 = vset.pattern.permute.xlu0 3
    %250 = vperm.xlu0 %249, %v24
    %v251 = vpop.permute.xlu0 %250
    %253 = vset.pattern.permute.xlu0 3
    %254 = vperm.xlu0 %253, %v25
    %v255 = vpop.permute.xlu0 %254
    %257 = vset.pattern.permute.xlu0 3
    %258 = vperm.xlu0 %257, %v26
    %v259 = vpop.permute.xlu0 %258
    %261 = vset.pattern.permute.xlu0 3
    %262 = vperm.xlu0 %261, %v27
    %v263 = vpop.permute.xlu0 %262
    %v265 = vperm.slane %v23, 3
    %v266 = vmul.f32 %v251, %v265
    %v267 = vmul.f32 %v255, %v265
    %v268 = vmul.f32 %v259, %v265
    %v269 = vmul.f32 %v263, %v265
    %270 = vset.pattern.permute.xlu0 3
    %271 = vperm.xlu0 %270, %v28
    %v272 = vpop.permute.xlu0 %271
    %274 = vset.pattern.permute.xlu0 3
    %275 = vperm.xlu0 %274, %v29
    %v276 = vpop.permute.xlu0 %275
    %278 = vset.pattern.permute.xlu0 3
    %279 = vperm.xlu0 %278, %v30
    %v280 = vpop.permute.xlu0 %279
    %282 = vset.pattern.permute.xlu0 3
    %283 = vperm.xlu0 %282, %v31
    %v284 = vpop.permute.xlu0 %283
    %v286 = vadd.f32 %v266, %v272
    %v287 = vadd.f32 %v267, %v276
    %v288 = vadd.f32 %v268, %v280
    %v289 = vadd.f32 %v269, %v284
    %v290 = vmax.f32 %v286, 0.0
    %v291 = vmax.f32 %v287, 0.0
    %v292 = vmax.f32 %v288, 0.0
    %v293 = vmax.f32 %v289, 0.0
    %294 = vrot.lane.b32.xlu0 %v85, 32
    %v295 = vpop.permute.xlu0 %294
    %v296 = vsel %vm134, %v295, 0
    %298 = vmatpush.msra.mxu0 0.0
    %299 = vmatpush.msra.mxu0 0.0
    %300 = vmatpush.msra.mxu0 0.0
    %301 = vmatpush.msra.mxu0 0.0
    %302 = vmatpush.msra.mxu0 0.0
    %303 = vmatpush.msra.mxu0 0.0
    %304 = vmatpush.msra.mxu0 0.0
    %305 = vmatpush.msra.mxu0 0.0
    %306 = vmatpush.msra.mxu0 0.0
    %307 = vmatpush.msra.mxu0 0.0
    %308 = vmatpush.msra.mxu0 0.0
    %309 = vmatpush.msra.mxu0 0.0
    %310 = vmatpush.msra.mxu0 %v293
    %311 = vmatpush.msra.mxu0 %v292
    %312 = vmatpush.msra.mxu0 %v291
    %313 = vmatpush.msra.mxu0 %v290
    %314 = vmatmul.f32.gmra.mxu0 %v296
    %v315 = vpop.f32.mrf.mxu0
    %v316 = vadd.f32 0.0, %v315
    %317 = vdwg.mxu0
    %v318 = vadd.f32 %v248, %v316
    %v319 = vld [vmem:[#allocation2] sm:$0x1]
    %321 = vset.pattern.permute.xlu0 0
    %322 = vperm.xlu0 %321, %v319
    %v323 = vpop.permute.xlu0 %322
    %v325 = vperm.slane %v323, 0
    %v326 = vadd.f32 %v318, %v325
    %vm327 = vcmask 57344
    %328 = vst.msk [vmem:[#allocation3] sm:$0x1] %vm327, %v326
    // Predicated region
    $region22: #{tpu_custom_call.1} parent=1 // pred_check
      _
    $region23: #{tpu_custom_call.1} parent=1 // pred_check_branch
      %330 = sbr.rel (0) target = $region25
    $region24: #{tpu_custom_call.1} parent=1 // pred_region
      %332 = vsyncadd [#allocation4], 0
      %s334 = sshll.u32 [#allocation3], 4
      %s335 = int_to_ptr.vmem [resolvable:$true] %s334
      %s336 = sshll.u32 %s5, 4
      %s337 = int_to_ptr.hbm [resolvable:$true] %s336
      %339 = dma.vmem_to_hbm [thread:$0]  %s335, 16, %s337, [#allocation4]
    $region25: #{tpu_custom_call.1} parent=1 // pred_fallthru
      _
    // Predicated region
    $region26: #{tpu_custom_call.1} parent=1 // pred_check
      _
    $region27: #{tpu_custom_call.1} parent=1 // pred_check_branch
      %341 = sbr.rel (0) target = $region29
    $region28: #{tpu_custom_call.1} parent=1 // pred_region
      %343 = dma.done [#allocation4], 16
    $region29: #{tpu_custom_call.1} parent=1 // pred_fallthru
      _
    %344 = vsyncpa [#allocation4], 1

</llo_original>
